<compile_context>
chip_gen: v6e
topology: v6e:2x2x1
jax: 0.10.0
libtpu: 0.0.40
codegen_flags: <defaults>
</compile_context>

<pallas_src>
import jax
import jax.numpy as jnp
from jax.experimental import pallas as pl
from jax.experimental.pallas import tpu as pltpu


def _round_up(x, m):
    return ((x + m - 1) // m) * m


def _num_tensorcores():
    """Best-effort TensorCore-per-chip count (2 on v7x/megacore, else 1)."""
    try:
        info = pltpu.get_tpu_info()
        for attr in ("num_tensorcores", "tensorcore_count", "num_cores",
                     "core_count", "num_cores_per_chip"):
            n = getattr(info, attr, None)
            if isinstance(n, int) and n > 0:
                return n
    except Exception:
        pass
    try:
        kind = jax.devices()[0].device_kind.lower()
        if ("v7" in kind) or ("v4" in kind) or ("v5p" in kind):
            return 2
    except Exception:
        pass
    return 1


# ---------------------------------------------------------------------------
# Pallas kernel: fused MLP forward (4 Linear layers, ReLU on the 3 hidden ones)
# ---------------------------------------------------------------------------
def _policy_mlp_kernel(x_ref,
                       w1_ref, b1_ref,
                       w2_ref, b2_ref,
                       w3_ref, b3_ref,
                       w4_ref, b4_ref,
                       out_ref):
    # single f32 -> bf16 cast on the input (MXU is bf16-native)
    x = x_ref[...].astype(jnp.bfloat16)

    # layer 1: Linear + ReLU   (bf16 matmul, f32 accumulate / bias / ReLU)
    h = jnp.dot(x, w1_ref[...], preferred_element_type=jnp.float32) + b1_ref[...]
    h = jnp.maximum(h, 0.0).astype(jnp.bfloat16)
    # layer 2: Linear + ReLU
    h = jnp.dot(h, w2_ref[...], preferred_element_type=jnp.float32) + b2_ref[...]
    h = jnp.maximum(h, 0.0).astype(jnp.bfloat16)
    # layer 3: Linear + ReLU  (width padded 64 -> 128 lanes; pad cols are zero)
    h = jnp.dot(h, w3_ref[...], preferred_element_type=jnp.float32) + b3_ref[...]
    h = jnp.maximum(h, 0.0).astype(jnp.bfloat16)
    # layer 4: Linear + Identity (true action_size width -> minimal writeback)
    logits = jnp.dot(h, w4_ref[...], preferred_element_type=jnp.float32) + b4_ref[...]

    out_ref[...] = logits.astype(out_ref.dtype)


# ---------------------------------------------------------------------------
# One-time parameter preparation (hoisted out of the per-call path)
# ---------------------------------------------------------------------------
def prepare_policy_params(params):
    """Pad the 64-wide hidden layer to 128 lanes and cast weights to bf16.

    Call once; pass the result to policy_mlp_forward / policy_network_forward
    every rollout step.  Pad columns of W3/b3 and pad rows of W4 are exactly
    zero, so the math is unchanged.
    """
    (w1, b1), (w2, b2), (w3, b3), (w4, b4) = params
    h3 = w3.shape[1]
    h3p = _round_up(h3, 128)
    w3p = jnp.pad(w3, ((0, 0), (0, h3p - h3)))
    b3p = jnp.pad(b3, ((0, 0), (0, h3p - h3)))
    w4p = jnp.pad(w4, ((0, h3p - h3), (0, 0)))
    return {
        "w1": w1.astype(jnp.bfloat16), "b1": b1.astype(jnp.float32),
        "w2": w2.astype(jnp.bfloat16), "b2": b2.astype(jnp.float32),
        "w3": w3p.astype(jnp.bfloat16), "b3": b3p.astype(jnp.float32),
        "w4": w4p.astype(jnp.bfloat16), "b4": b4.astype(jnp.float32),
        "state_size": int(w1.shape[0]),
        "action_size": int(w4.shape[1]),
    }


# ---------------------------------------------------------------------------
# Kernel wrapper
# ---------------------------------------------------------------------------
def policy_mlp_forward(state, prep, *, batch_tile=4096):
    """Run the fused MLP kernel.  state: (B, state_size) float32.

    `prep` is the dict returned by prepare_policy_params.
    """
    B, state_size = state.shape
    assert state_size == prep["state_size"]
    action_size = prep["action_size"]

    # ---- balanced batch tiling ----
    num_cores = _num_tensorcores()
    b_pad8 = _round_up(B, 8)
    max_bt = max(8, _round_up(int(batch_tile), 8))
    n_tiles = pl.cdiv(b_pad8, max_bt)
    if num_cores >= 2 and b_pad8 >= 16:
        # v7x megacore: at least 2 tiles, even count for load balance.
        n_tiles = max(n_tiles, 2)
        if n_tiles % 2:
            n_tiles += 1
    bt = _round_up(pl.cdiv(b_pad8, n_tiles), 8)
    b_padded = _round_up(B, bt)
    if b_padded != B:
        state = jnp.pad(state, ((0, b_padded - B), (0, 0)))
    grid = (b_padded // bt,)

    # Weights / biases are small (~100 KB total): each is one full resident block.
    def full_spec(shape):
        return pl.BlockSpec(shape, lambda i: (0, 0))

    out = pl.pallas_call(
        _policy_mlp_kernel,
        out_shape=jax.ShapeDtypeStruct((b_padded, action_size), jnp.float32),
        grid_spec=pltpu.PrefetchScalarGridSpec(
            num_scalar_prefetch=0,
            grid=grid,
            in_specs=[
                pl.BlockSpec((bt, state_size), lambda i: (i, 0)),
                full_spec(prep["w1"].shape), full_spec(prep["b1"].shape),
                full_spec(prep["w2"].shape), full_spec(prep["b2"].shape),
                full_spec(prep["w3"].shape), full_spec(prep["b3"].shape),
                full_spec(prep["w4"].shape), full_spec(prep["b4"].shape),
            ],
            out_specs=pl.BlockSpec((bt, action_size), lambda i: (i, 0)),
        ),
        compiler_params=pltpu.CompilerParams(
            dimension_semantics=("parallel",)),
    )(state,
      prep["w1"], prep["b1"],
      prep["w2"], prep["b2"],
      prep["w3"], prep["b3"],
      prep["w4"], prep["b4"])

    # only a row-prefix slice remains, and only if the batch was padded
    if b_padded != B:
        out = out[:B]
    return out


# ---------------------------------------------------------------------------
# Parameter construction (deterministic, PyTorch-Linear-style uniform init)
# ---------------------------------------------------------------------------
def init_policy_params(key, state_size, action_size, hidden_size_list=None):
    if hidden_size_list is None:
        hidden_size_list = [128, 128, 64]
    size_list = [state_size] + hidden_size_list + [action_size]
    params = []
    for j in range(1, len(size_list)):
        fan_in, fan_out = size_list[j - 1], size_list[j]
        key, kw, kb = jax.random.split(key, 3)
        bound = 1.0 / (fan_in ** 0.5)
        # stored as (in, out) so the kernel does x @ W
        w = jax.random.uniform(kw, (fan_in, fan_out), jnp.float32, -bound, bound)
        b = jax.random.uniform(kb, (1, fan_out), jnp.float32, -bound, bound)
        params.append((w, b))
    # nn.Parameter(torch.zeros(action_size,)) -> log_std
    log_std = jnp.zeros((action_size,), jnp.float32)
    return params, log_std


def policy_network_forward(state, prep, log_std, action_type="discrete"):
    """Mirrors PolicyNetwork.forward.  Returns the distribution parameters."""
    logits = policy_mlp_forward(state, prep)
    if action_type == "discrete":
        # TODO(synk): torch.distributions.Categorical object construction has no
        # Pallas equivalent; we return its logits.
        return {"logits": logits}
    else:
        # Normal(mean=mlp(state), std=exp(log_std))
        return {"loc": logits, "scale": jnp.exp(log_std)}


# ---------------------------------------------------------------------------
# Pure-JAX references for correctness check
# ---------------------------------------------------------------------------
def _ref_forward_f32(state, params):
    h = state
    for idx, (w, b) in enumerate(params):
        h = h @ w + b
        if idx < len(params) - 1:
            h = jnp.maximum(h, 0.0)
    return h


def _ref_forward_bf16(state, params):
    # mirrors the kernel's mixed precision: bf16 matmul operands, f32 accumulate
    h = state.astype(jnp.bfloat16)
    for idx, (w, b) in enumerate(params):
        h = jnp.dot(h, w.astype(jnp.bfloat16),
                    preferred_element_type=jnp.float32) + b
        if idx < len(params) - 1:
            h = jnp.maximum(h, 0.0).astype(jnp.bfloat16)
    return h


if __name__ == "__main__":
    key = jax.random.PRNGKey(0)

    batch = 8
    state_size = 16
    action_size = 8

    k_params, k_state = jax.random.split(key)
    params, log_std = init_policy_params(k_params, state_size, action_size)
    prep = prepare_policy_params(params)            # one-time padding / bf16 cast
    state = jax.random.normal(k_state, (batch, state_size), jnp.float32)

    out = policy_network_forward(state, prep, log_std, action_type="discrete")
    logits = jax.block_until_ready(out["logits"])
    assert logits.shape == (batch, action_size)

    # check against bf16-mirrored reference (tight) and f32 reference (loose)
    ref_bf16 = _ref_forward_bf16(state, params)
    ref_f32 = _ref_forward_f32(state, params)
    assert jnp.allclose(logits, ref_bf16, atol=1e-2, rtol=1e-2), "mismatch vs bf16 reference"
    assert jnp.allclose(logits, ref_f32, atol=5e-2, rtol=5e-2), "mismatch vs f32 reference"

    # non-multiple batch: exercises batch padding (and the 2-tile path on v7x)
    state_odd = jax.random.normal(k_state, (21, state_size), jnp.float32)
    logits_odd = jax.block_until_ready(policy_mlp_forward(state_odd, prep))
    assert logits_odd.shape == (21, action_size)
    assert jnp.allclose(logits_odd, _ref_forward_f32(state_odd, params),
                        atol=5e-2, rtol=5e-2), "mismatch on odd batch"

    # force a multi-tile grid with a tiny batch_tile to exercise balanced tiling
    state_multi = jax.random.normal(k_state, (40, state_size), jnp.float32)
    logits_multi = jax.block_until_ready(
        policy_mlp_forward(state_multi, prep, batch_tile=16))
    assert logits_multi.shape == (40, action_size)
    assert jnp.allclose(logits_multi, _ref_forward_f32(state_multi, params),
                        atol=5e-2, rtol=5e-2), "mismatch on multi-tile batch"

    # also exercise the continuous branch once
    cont = policy_network_forward(state, prep, log_std, action_type="continuous")
    jax.block_until_ready(cont["loc"])
    jax.block_until_ready(cont["scale"])

    print("KERNEL_OK")
</pallas_src>

<mosaic_0001>
module attributes {stable_mosaic.version = 11 : i64} {
  func.func @_policy_mlp_kernel(%arg0: i32, %arg1: memref<8x16xf32, #tpu.memory_space<vmem>>, %arg2: memref<16x128xbf16, #tpu.memory_space<vmem>>, %arg3: memref<1x128xf32, #tpu.memory_space<vmem>>, %arg4: memref<128x128xbf16, #tpu.memory_space<vmem>>, %arg5: memref<1x128xf32, #tpu.memory_space<vmem>>, %arg6: memref<128x128xbf16, #tpu.memory_space<vmem>>, %arg7: memref<1x128xf32, #tpu.memory_space<vmem>>, %arg8: memref<128x8xbf16, #tpu.memory_space<vmem>>, %arg9: memref<1x8xf32, #tpu.memory_space<vmem>>, %arg10: memref<8x8xf32, #tpu.memory_space<vmem>>) attributes {dimension_semantics = [#tpu.dimension_semantics<parallel>], iteration_bounds = array<i64: 1>, scalar_prefetch = 0 : i64, scratch_operands = 0 : i64, tpu.core_type = #tpu.core_type<tc>, window_params = [{transform_indices = @transform_0, window_bounds = array<i64: 8, 16>}, {pipeline_mode = #tpu.pipeline_mode<synchronous>, transform_indices = @transform_1, window_bounds = array<i64: 16, 128>}, {pipeline_mode = #tpu.pipeline_mode<synchronous>, transform_indices = @transform_2, window_bounds = array<i64: 1, 128>}, {pipeline_mode = #tpu.pipeline_mode<synchronous>, transform_indices = @transform_3, window_bounds = array<i64: 128, 128>}, {pipeline_mode = #tpu.pipeline_mode<synchronous>, transform_indices = @transform_4, window_bounds = array<i64: 1, 128>}, {pipeline_mode = #tpu.pipeline_mode<synchronous>, transform_indices = @transform_5, window_bounds = array<i64: 128, 128>}, {pipeline_mode = #tpu.pipeline_mode<synchronous>, transform_indices = @transform_6, window_bounds = array<i64: 1, 128>}, {pipeline_mode = #tpu.pipeline_mode<synchronous>, transform_indices = @transform_7, window_bounds = array<i64: 128, 8>}, {pipeline_mode = #tpu.pipeline_mode<synchronous>, transform_indices = @transform_8, window_bounds = array<i64: 1, 8>}, {transform_indices = @transform_9, window_bounds = array<i64: 8, 8>}]} {
    %c0 = arith.constant 0 : index
    %c0_0 = arith.constant 0 : index
    %0 = vector.load %arg1[%c0, %c0_0] : memref<8x16xf32, #tpu.memory_space<vmem>>, vector<8x16xf32>
    %1 = arith.truncf %0 : vector<8x16xf32> to vector<8x16xbf16>
    %c0_1 = arith.constant 0 : index
    %c0_2 = arith.constant 0 : index
    %2 = vector.load %arg2[%c0_1, %c0_2] : memref<16x128xbf16, #tpu.memory_space<vmem>>, vector<16x128xbf16>
    %cst = arith.constant dense<0.000000e+00> : vector<8x128xf32>
    %3 = tpu.matmul %1, %2, %cst {dimension_numbers = #tpu.dot_dimension_numbers<[1], [0], [0], [1], [0, 0, 1, 1], [], []>} : vector<8x16xbf16>, vector<16x128xbf16>, vector<8x128xf32> -> vector<8x128xf32>
    %c0_3 = arith.constant 0 : index
    %c0_4 = arith.constant 0 : index
    %4 = vector.load %arg3[%c0_3, %c0_4] : memref<1x128xf32, #tpu.memory_space<vmem>>, vector<1x128xf32>
    %5 = vector.broadcast %4 : vector<1x128xf32> to vector<8x128xf32>
    %6 = arith.addf %3, %5 : vector<8x128xf32>
    %cst_5 = arith.constant 0.000000e+00 : f32
    %7 = vector.broadcast %cst_5 : f32 to vector<8x128xf32>
    %8 = arith.maximumf %6, %7 : vector<8x128xf32>
    %9 = arith.truncf %8 : vector<8x128xf32> to vector<8x128xbf16>
    %c0_6 = arith.constant 0 : index
    %c0_7 = arith.constant 0 : index
    %10 = vector.load %arg4[%c0_6, %c0_7] : memref<128x128xbf16, #tpu.memory_space<vmem>>, vector<128x128xbf16>
    %cst_8 = arith.constant dense<0.000000e+00> : vector<8x128xf32>
    %11 = tpu.matmul %9, %10, %cst_8 {dimension_numbers = #tpu.dot_dimension_numbers<[1], [0], [0], [1], [0, 0, 1, 1], [], []>} : vector<8x128xbf16>, vector<128x128xbf16>, vector<8x128xf32> -> vector<8x128xf32>
    %c0_9 = arith.constant 0 : index
    %c0_10 = arith.constant 0 : index
    %12 = vector.load %arg5[%c0_9, %c0_10] : memref<1x128xf32, #tpu.memory_space<vmem>>, vector<1x128xf32>
    %13 = vector.broadcast %12 : vector<1x128xf32> to vector<8x128xf32>
    %14 = arith.addf %11, %13 : vector<8x128xf32>
    %cst_11 = arith.constant 0.000000e+00 : f32
    %15 = vector.broadcast %cst_11 : f32 to vector<8x128xf32>
    %16 = arith.maximumf %14, %15 : vector<8x128xf32>
    %17 = arith.truncf %16 : vector<8x128xf32> to vector<8x128xbf16>
    %c0_12 = arith.constant 0 : index
    %c0_13 = arith.constant 0 : index
    %18 = vector.load %arg6[%c0_12, %c0_13] : memref<128x128xbf16, #tpu.memory_space<vmem>>, vector<128x128xbf16>
    %cst_14 = arith.constant dense<0.000000e+00> : vector<8x128xf32>
    %19 = tpu.matmul %17, %18, %cst_14 {dimension_numbers = #tpu.dot_dimension_numbers<[1], [0], [0], [1], [0, 0, 1, 1], [], []>} : vector<8x128xbf16>, vector<128x128xbf16>, vector<8x128xf32> -> vector<8x128xf32>
    %c0_15 = arith.constant 0 : index
    %c0_16 = arith.constant 0 : index
    %20 = vector.load %arg7[%c0_15, %c0_16] : memref<1x128xf32, #tpu.memory_space<vmem>>, vector<1x128xf32>
    %21 = vector.broadcast %20 : vector<1x128xf32> to vector<8x128xf32>
    %22 = arith.addf %19, %21 : vector<8x128xf32>
    %cst_17 = arith.constant 0.000000e+00 : f32
    %23 = vector.broadcast %cst_17 : f32 to vector<8x128xf32>
    %24 = arith.maximumf %22, %23 : vector<8x128xf32>
    %25 = arith.truncf %24 : vector<8x128xf32> to vector<8x128xbf16>
    %c0_18 = arith.constant 0 : index
    %c0_19 = arith.constant 0 : index
    %26 = vector.load %arg8[%c0_18, %c0_19] : memref<128x8xbf16, #tpu.memory_space<vmem>>, vector<128x8xbf16>
    %cst_20 = arith.constant dense<0.000000e+00> : vector<8x8xf32>
    %27 = tpu.matmul %25, %26, %cst_20 {dimension_numbers = #tpu.dot_dimension_numbers<[1], [0], [0], [1], [0, 0, 1, 1], [], []>} : vector<8x128xbf16>, vector<128x8xbf16>, vector<8x8xf32> -> vector<8x8xf32>
    %c0_21 = arith.constant 0 : index
    %c0_22 = arith.constant 0 : index
    %28 = vector.load %arg9[%c0_21, %c0_22] : memref<1x8xf32, #tpu.memory_space<vmem>>, vector<1x8xf32>
    %29 = vector.broadcast %28 : vector<1x8xf32> to vector<8x8xf32>
    %30 = arith.addf %27, %29 : vector<8x8xf32>
    %c0_23 = arith.constant 0 : index
    %c0_24 = arith.constant 0 : index
    %31 = vector.load %arg10[%c0_23, %c0_24] : memref<8x8xf32, #tpu.memory_space<vmem>>, vector<8x8xf32>
    tpu.vector_store %arg10[%c0_23, %c0_24], %30 {strides = array<i32>} : memref<8x8xf32, #tpu.memory_space<vmem>>, vector<8x8xf32>,
    return
  }
  func.func @transform_0(%arg0: i32) -> (i32, i32) {
    %c0_i32 = arith.constant 0 : i32
    %c0_i32_0 = arith.constant 0 : i32
    return %arg0, %c0_i32 : i32, i32
  }
  func.func @transform_1(%arg0: i32) -> (i32, i32) {
    %c0_i32 = arith.constant 0 : i32
    %c0_i32_0 = arith.constant 0 : i32
    %c0_i32_1 = arith.constant 0 : i32
    return %c0_i32, %c0_i32_0 : i32, i32
  }
  func.func @transform_2(%arg0: i32) -> (i32, i32) {
    %c0_i32 = arith.constant 0 : i32
    %c0_i32_0 = arith.constant 0 : i32
    %c0_i32_1 = arith.constant 0 : i32
    return %c0_i32, %c0_i32_0 : i32, i32
  }
  func.func @transform_3(%arg0: i32) -> (i32, i32) {
    %c0_i32 = arith.constant 0 : i32
    %c0_i32_0 = arith.constant 0 : i32
    %c0_i32_1 = arith.constant 0 : i32
    return %c0_i32, %c0_i32_0 : i32, i32
  }
  func.func @transform_4(%arg0: i32) -> (i32, i32) {
    %c0_i32 = arith.constant 0 : i32
    %c0_i32_0 = arith.constant 0 : i32
    %c0_i32_1 = arith.constant 0 : i32
    return %c0_i32, %c0_i32_0 : i32, i32
  }
  func.func @transform_5(%arg0: i32) -> (i32, i32) {
    %c0_i32 = arith.constant 0 : i32
    %c0_i32_0 = arith.constant 0 : i32
    %c0_i32_1 = arith.constant 0 : i32
    return %c0_i32, %c0_i32_0 : i32, i32
  }
  func.func @transform_6(%arg0: i32) -> (i32, i32) {
    %c0_i32 = arith.constant 0 : i32
    %c0_i32_0 = arith.constant 0 : i32
    %c0_i32_1 = arith.constant 0 : i32
    return %c0_i32, %c0_i32_0 : i32, i32
  }
  func.func @transform_7(%arg0: i32) -> (i32, i32) {
    %c0_i32 = arith.constant 0 : i32
    %c0_i32_0 = arith.constant 0 : i32
    %c0_i32_1 = arith.constant 0 : i32
    return %c0_i32, %c0_i32_0 : i32, i32
  }
  func.func @transform_8(%arg0: i32) -> (i32, i32) {
    %c0_i32 = arith.constant 0 : i32
    %c0_i32_0 = arith.constant 0 : i32
    %c0_i32_1 = arith.constant 0 : i32
    return %c0_i32, %c0_i32_0 : i32, i32
  }
  func.func @transform_9(%arg0: i32) -> (i32, i32) {
    %c0_i32 = arith.constant 0 : i32
    %c0_i32_0 = arith.constant 0 : i32
    return %arg0, %c0_i32 : i32, i32
  }
}

</mosaic_0001>

<llo_original>
// kernel: tpu_custom_call.1
$region0: #{tpu_custom_call.1}
  #allocation0 [shape = 'u32[]', space=smem, size = 0x4, offset = 0x4, fixed_abs, tag = 'smem constant byte address 0x4 - core index']
  #allocation1 [shape = 'u32[144,128]{1,0:T(1,128)}', space=vmem, size = 0x12000, scoped, tag = 'internal scratch']
  %s0 = inlined_call_operand.vmem [shape: f32[8,16], index: 0, kind: input, shape index: {}]
  %s1 = inlined_call_operand.hbm [shape: bf16[16,128], index: 1, kind: input, shape index: {}]
  %s2 = inlined_call_operand.vmem [shape: f32[1,128], index: 2, kind: input, shape index: {}]
  %s3 = inlined_call_operand.vmem [shape: bf16[128,128], index: 3, kind: input, shape index: {}]
  %s4 = inlined_call_operand.hbm [shape: f32[1,128], index: 4, kind: input, shape index: {}]
  %s5 = inlined_call_operand.hbm [shape: bf16[128,128], index: 5, kind: input, shape index: {}]
  %s6 = inlined_call_operand.vmem [shape: f32[1,128], index: 6, kind: input, shape index: {}]
  %s7 = inlined_call_operand.vmem [shape: bf16[128,8], index: 7, kind: input, shape index: {}]
  %s8 = inlined_call_operand.vmem [shape: f32[1,8], index: 8, kind: input, shape index: {}]
  %s9 = inlined_call_operand.hbm [shape: f32[8,8], index: 9, kind: output, shape index: {}]
  %s10 = sld [smem:[#allocation0]]
  $region58: #{tpu_custom_call.1} parent=0
    _
  %s12 = ssub.s32 1, %s10
  %s13 = scalar_select 0, %s12, %s10
  $region1: #{tpu_custom_call.1} parent=0
    #allocation2 [shape = 'u8[4096]{0}', space=vmem, size = 0x1000, scoped, tag = 'input window, operand 1, single buffered']
    #allocation3 [shape = 's32[1]{0}', space=sflag, size = 0x4, scoped, tag = 'scoped memory for tpu_custom_call.1']
    #allocation4 [shape = 's32[1]{0}', space=sflag, size = 0x4, scoped, tag = 'scoped memory for tpu_custom_call.1']
    #allocation5 [shape = 'u8[512]{0}', space=vmem, size = 0x400, scoped, tag = 'input window, operand 4, single buffered']
    #allocation6 [shape = 's32[1]{0}', space=sflag, size = 0x4, scoped, tag = 'scoped memory for tpu_custom_call.1']
    #allocation7 [shape = 'u8[32768]{0}', space=vmem, size = 0x8000, scoped, tag = 'input window, operand 5, single buffered']
    #allocation8 [shape = 'u8[4096]{0}', space=vmem, size = 0x1000, scoped, tag = 'output window, operand 0, single buffered']
    %14 = vsyncpa [#allocation3], 0
    %15 = vsyncpa [#allocation6], 0
    %16 = vsyncpa [#allocation4], 0
    // Predicated region
    $region2: #{tpu_custom_call.1} parent=1 // pred_check
      _
    $region3: #{tpu_custom_call.1} parent=1 // pred_check_branch
      %18 = sbr.rel (0) target = $region5
    $region4: #{tpu_custom_call.1} parent=1 // pred_region
      _
    $region5: #{tpu_custom_call.1} parent=1 // pred_fallthru
      _
    // Predicated region
    $region6: #{tpu_custom_call.1} parent=1 // pred_check
      _
    $region7: #{tpu_custom_call.1} parent=1 // pred_check_branch
      %20 = sbr.rel (0) target = $region9
    $region8: #{tpu_custom_call.1} parent=1 // pred_region
      %s22 = ssub.s32 128, 128
      %23 = vsyncadd [#allocation3], %s22
      %s24 = sshll.u32 [#allocation2], 4
      %s25 = int_to_ptr.vmem [resolvable:$true] %s24
      %30 = dma.hbm_to_vmem [thread:$0]  %s1, 128, %s25, [#allocation3], 64, 64, 4
    $region9: #{tpu_custom_call.1} parent=1 // pred_fallthru
      _
    // Predicated region
    $region10: #{tpu_custom_call.1} parent=1 // pred_check
      _
    $region11: #{tpu_custom_call.1} parent=1 // pred_check_branch
      %32 = sbr.rel (0) target = $region13
    $region12: #{tpu_custom_call.1} parent=1 // pred_region
      _
    $region13: #{tpu_custom_call.1} parent=1 // pred_fallthru
      _
    // Predicated region
    $region14: #{tpu_custom_call.1} parent=1 // pred_check
      _
    $region15: #{tpu_custom_call.1} parent=1 // pred_check_branch
      %34 = sbr.rel (0) target = $region17
    $region16: #{tpu_custom_call.1} parent=1 // pred_region
      _
    $region17: #{tpu_custom_call.1} parent=1 // pred_fallthru
      _
    // Predicated region
    $region18: #{tpu_custom_call.1} parent=1 // pred_check
      _
    $region19: #{tpu_custom_call.1} parent=1 // pred_check_branch
      %36 = sbr.rel (0) target = $region21
    $region20: #{tpu_custom_call.1} parent=1 // pred_region
      %s38 = ssub.s32 16, 16
      %39 = vsyncadd [#allocation6], %s38
      %s41 = sshll.u32 [#allocation5], 4
      %s42 = int_to_ptr.vmem [resolvable:$true] %s41
      %44 = dma.hbm_to_vmem [thread:$0]  %s4, 16, %s42, [#allocation6]
    $region21: #{tpu_custom_call.1} parent=1 // pred_fallthru
      _
    // Predicated region
    $region22: #{tpu_custom_call.1} parent=1 // pred_check
      _
    $region23: #{tpu_custom_call.1} parent=1 // pred_check_branch
      %46 = sbr.rel (0) target = $region25
    $region24: #{tpu_custom_call.1} parent=1 // pred_region
      %s48 = ssub.s32 1024, 1024
      %49 = vsyncadd [#allocation6], %s48
      %s50 = sshll.u32 [#allocation7], 4
      %s51 = int_to_ptr.vmem [resolvable:$true] %s50
      %56 = dma.hbm_to_vmem [thread:$0]  %s5, 1024, %s51, [#allocation6], 64, 64, 4
    $region25: #{tpu_custom_call.1} parent=1 // pred_fallthru
      _
    // Predicated region
    $region26: #{tpu_custom_call.1} parent=1 // pred_check
      _
    $region27: #{tpu_custom_call.1} parent=1 // pred_check_branch
      %58 = sbr.rel (0) target = $region29
    $region28: #{tpu_custom_call.1} parent=1 // pred_region
      _
    $region29: #{tpu_custom_call.1} parent=1 // pred_fallthru
      _
    // Predicated region
    $region30: #{tpu_custom_call.1} parent=1 // pred_check
      _
    $region31: #{tpu_custom_call.1} parent=1 // pred_check_branch
      %60 = sbr.rel (0) target = $region33
    $region32: #{tpu_custom_call.1} parent=1 // pred_region
      _
    $region33: #{tpu_custom_call.1} parent=1 // pred_fallthru
      _
    // Predicated region
    $region34: #{tpu_custom_call.1} parent=1 // pred_check
      _
    $region35: #{tpu_custom_call.1} parent=1 // pred_check_branch
      %62 = sbr.rel (0) target = $region37
    $region36: #{tpu_custom_call.1} parent=1 // pred_region
      _
    $region37: #{tpu_custom_call.1} parent=1 // pred_fallthru
      _
    // Predicated region
    $region38: #{tpu_custom_call.1} parent=1 // pred_check
      _
    $region39: #{tpu_custom_call.1} parent=1 // pred_check_branch
      %64 = sbr.rel (0) target = $region41
    $region40: #{tpu_custom_call.1} parent=1 // pred_region
      %65 = dma.done [#allocation3], 128
    $region41: #{tpu_custom_call.1} parent=1 // pred_fallthru
      _
    // Predicated region
    $region42: #{tpu_custom_call.1} parent=1 // pred_check
      _
    $region43: #{tpu_custom_call.1} parent=1 // pred_check_branch
      %67 = sbr.rel (0) target = $region45
    $region44: #{tpu_custom_call.1} parent=1 // pred_region
      %68 = dma.done [#allocation6], 16
    $region45: #{tpu_custom_call.1} parent=1 // pred_fallthru
      _
    // Predicated region
    $region46: #{tpu_custom_call.1} parent=1 // pred_check
      _
    $region47: #{tpu_custom_call.1} parent=1 // pred_check_branch
      %70 = sbr.rel (0) target = $region49
    $region48: #{tpu_custom_call.1} parent=1 // pred_region
      %71 = dma.done [#allocation6], 1024
    $region49: #{tpu_custom_call.1} parent=1 // pred_fallthru
      _
    %v73 = vld [vmem:[%s0] sm:$0xff]
    %v74 = vpack.c.bf16 %v73, %v73
    %v75 = vld [vmem:[#allocation2] sm:$0xf]
    %v76 = vld [vmem:[#allocation2 + $0x4] sm:$0xf]
    %v77 = vld [vmem:[%s2] sm:$0x1]
    %v79 = vlaneseq
    %v80 = vshrl.u32 %v79, 7
    %v81 = vsub.s32 0, %v80
    %v82 = vrot.slane %v77, %v81
    %v86 = vunpack.c.l.b16 %v75
    %v87 = vunpack.c.l.b16 %v76
    %v88 = vpack.c.b16 %v87, %v86
    %vm90 = vcmask 130048
    %v92 = vsel %vm90, %v74, 0
    %94 = vmatprep.subr.bf16.mxu0 0
    %95 = vmatpush1.bf16.msra.mxu0 0
    %96 = vmatprep.subr.bf16.mxu0 0
    %97 = vmatpush1.bf16.msra.mxu0 0
    %98 = vmatprep.subr.bf16.mxu0 0
    %99 = vmatpush1.bf16.msra.mxu0 0
    %100 = vmatprep.subr.bf16.mxu0 0
    %101 = vmatpush1.bf16.msra.mxu0 0
    %102 = vmatprep.subr.bf16.mxu0 0
    %103 = vmatpush1.bf16.msra.mxu0 0
    %104 = vmatprep.subr.bf16.mxu0 0
    %105 = vmatpush1.bf16.msra.mxu0 0
    %106 = vmatprep.subr.bf16.mxu0 0
    %107 = vmatpush1.bf16.msra.mxu0 0
    %108 = vmatprep.subr.bf16.mxu0 0
    %109 = vmatpush1.bf16.msra.mxu0 %v88
    %110 = vmatprep.subr.bf16.mxu0 0
    %111 = vmatpush2.bf16.msra.mxu0 0
    %112 = vmatprep.subr.bf16.mxu0 0
    %113 = vmatpush2.bf16.msra.mxu0 0
    %114 = vmatprep.subr.bf16.mxu0 0
    %115 = vmatpush2.bf16.msra.mxu0 0
    %116 = vmatprep.subr.bf16.mxu0 0
    %117 = vmatpush2.bf16.msra.mxu0 0
    %118 = vmatprep.subr.bf16.mxu0 0
    %119 = vmatpush2.bf16.msra.mxu0 0
    %120 = vmatprep.subr.bf16.mxu0 0
    %121 = vmatpush2.bf16.msra.mxu0 0
    %122 = vmatprep.subr.bf16.mxu0 0
    %123 = vmatpush2.bf16.msra.mxu0 0
    %124 = vmatprep.subr.bf16.mxu0 0
    %125 = vmatpush2.bf16.msra.mxu0 0
    %126 = vmatprep.mubr.bf16.mxu0 0
    %127 = vmatmul.mubr.bf16.gmra.mxu0 %v92
    %v128 = vpop.f32.mrf.mxu0
    %v129 = vadd.f32 %v82, %v128
    %v130 = vpop.f32.mrf.mxu0
    %v131 = vpop.f32.mrf.mxu0
    %v132 = vpop.f32.mrf.mxu0
    %133 = vdwg.mxu0
    %v134 = vmax.f32 %v129, 0.0
    %v135 = vpack.c.bf16 %v134, %v134
    %v136 = vld [vmem:[%s3] sm:$0xf]
    %v137 = vld [vmem:[%s3 + $0x4] sm:$0xf]
    %v138 = vld [vmem:[%s3 + $0x8] sm:$0xf]
    %v139 = vld [vmem:[%s3 + $0xc] sm:$0xf]
    %v140 = vld [vmem:[%s3 + $0x10] sm:$0xf]
    %v141 = vld [vmem:[%s3 + $0x14] sm:$0xf]
    %v142 = vld [vmem:[%s3 + $0x18] sm:$0xf]
    %v143 = vld [vmem:[%s3 + $0x1c] sm:$0xf]
    %v144 = vld [vmem:[%s3 + $0x20] sm:$0xf]
    %v145 = vld [vmem:[%s3 + $0x24] sm:$0xf]
    %v146 = vld [vmem:[%s3 + $0x28] sm:$0xf]
    %v147 = vld [vmem:[%s3 + $0x2c] sm:$0xf]
    %v148 = vld [vmem:[%s3 + $0x30] sm:$0xf]
    %v149 = vld [vmem:[%s3 + $0x34] sm:$0xf]
    %v150 = vld [vmem:[%s3 + $0x38] sm:$0xf]
    %v151 = vld [vmem:[%s3 + $0x3c] sm:$0xf]
    %v152 = vld [vmem:[#allocation5] sm:$0x1]
    %v154 = vlaneseq
    %v155 = vshrl.u32 %v154, 7
    %v156 = vsub.s32 0, %v155
    %v157 = vrot.slane %v152, %v156
    %v175 = vunpack.c.l.b16 %v136
    %v176 = vunpack.c.l.b16 %v137
    %v177 = vunpack.c.l.b16 %v138
    %v178 = vunpack.c.l.b16 %v139
    %v179 = vunpack.c.l.b16 %v140
    %v180 = vunpack.c.l.b16 %v141
    %v181 = vunpack.c.l.b16 %v142
    %v182 = vunpack.c.l.b16 %v143
    %v183 = vunpack.c.l.b16 %v144
    %v184 = vunpack.c.l.b16 %v145
    %v185 = vunpack.c.l.b16 %v146
    %v186 = vunpack.c.l.b16 %v147
    %v187 = vunpack.c.l.b16 %v148
    %v188 = vunpack.c.l.b16 %v149
    %v189 = vunpack.c.l.b16 %v150
    %v190 = vunpack.c.l.b16 %v151
    %v191 = vpack.c.b16 %v176, %v175
    %v192 = vpack.c.b16 %v178, %v177
    %v193 = vpack.c.b16 %v180, %v179
    %v194 = vpack.c.b16 %v182, %v181
    %v195 = vpack.c.b16 %v184, %v183
    %v196 = vpack.c.b16 %v186, %v185
    %v197 = vpack.c.b16 %v188, %v187
    %v198 = vpack.c.b16 %v190, %v189
    %207 = vmatprep.subr.bf16.mxu0 0
    %208 = vmatpush1.bf16.msra.mxu0 %v198
    %209 = vmatprep.subr.bf16.mxu0 0
    %210 = vmatpush1.bf16.msra.mxu0 %v197
    %211 = vmatprep.subr.bf16.mxu0 0
    %212 = vmatpush1.bf16.msra.mxu0 %v196
    %213 = vmatprep.subr.bf16.mxu0 0
    %214 = vmatpush1.bf16.msra.mxu0 %v195
    %215 = vmatprep.subr.bf16.mxu0 0
    %216 = vmatpush1.bf16.msra.mxu0 %v194
    %217 = vmatprep.subr.bf16.mxu0 0
    %218 = vmatpush1.bf16.msra.mxu0 %v193
    %219 = vmatprep.subr.bf16.mxu0 0
    %220 = vmatpush1.bf16.msra.mxu0 %v192
    %221 = vmatprep.subr.bf16.mxu0 0
    %222 = vmatpush1.bf16.msra.mxu0 %v191
    %223 = vmatprep.subr.bf16.mxu0 0
    %224 = vmatpush2.bf16.msra.mxu0 0
    %225 = vmatprep.subr.bf16.mxu0 0
    %226 = vmatpush2.bf16.msra.mxu0 0
    %227 = vmatprep.subr.bf16.mxu0 0
    %228 = vmatpush2.bf16.msra.mxu0 0
    %229 = vmatprep.subr.bf16.mxu0 0
    %230 = vmatpush2.bf16.msra.mxu0 0
    %231 = vmatprep.subr.bf16.mxu0 0
    %232 = vmatpush2.bf16.msra.mxu0 0
    %233 = vmatprep.subr.bf16.mxu0 0
    %234 = vmatpush2.bf16.msra.mxu0 0
    %235 = vmatprep.subr.bf16.mxu0 0
    %236 = vmatpush2.bf16.msra.mxu0 0
    %237 = vmatprep.subr.bf16.mxu0 0
    %238 = vmatpush2.bf16.msra.mxu0 0
    %239 = vmatprep.mubr.bf16.mxu0 0
    %240 = vmatmul.mubr.bf16.gmra.mxu0 %v135
    %v241 = vpop.f32.mrf.mxu0
    %v242 = vadd.f32 %v157, %v241
    %v243 = vpop.f32.mrf.mxu0
    %v244 = vpop.f32.mrf.mxu0
    %v245 = vpop.f32.mrf.mxu0
    %246 = vdwg.mxu0
    %v247 = vmax.f32 %v242, 0.0
    %v248 = vpack.c.bf16 %v247, %v247
    %v249 = vld [vmem:[#allocation7] sm:$0xf]
    %v250 = vld [vmem:[#allocation7 + $0x4] sm:$0xf]
    %v251 = vld [vmem:[#allocation7 + $0x8] sm:$0xf]
    %v252 = vld [vmem:[#allocation7 + $0xc] sm:$0xf]
    %v253 = vld [vmem:[#allocation7 + $0x10] sm:$0xf]
    %v254 = vld [vmem:[#allocation7 + $0x14] sm:$0xf]
    %v255 = vld [vmem:[#allocation7 + $0x18] sm:$0xf]
    %v256 = vld [vmem:[#allocation7 + $0x1c] sm:$0xf]
    %v257 = vld [vmem:[#allocation7 + $0x20] sm:$0xf]
    %v258 = vld [vmem:[#allocation7 + $0x24] sm:$0xf]
    %v259 = vld [vmem:[#allocation7 + $0x28] sm:$0xf]
    %v260 = vld [vmem:[#allocation7 + $0x2c] sm:$0xf]
    %v261 = vld [vmem:[#allocation7 + $0x30] sm:$0xf]
    %v262 = vld [vmem:[#allocation7 + $0x34] sm:$0xf]
    %v263 = vld [vmem:[#allocation7 + $0x38] sm:$0xf]
    %v264 = vld [vmem:[#allocation7 + $0x3c] sm:$0xf]
    %v265 = vld [vmem:[%s6] sm:$0x1]
    %v267 = vlaneseq
    %v268 = vshrl.u32 %v267, 7
    %v269 = vsub.s32 0, %v268
    %v270 = vrot.slane %v265, %v269
    %v288 = vunpack.c.l.b16 %v249
    %v289 = vunpack.c.l.b16 %v250
    %v290 = vunpack.c.l.b16 %v251
    %v291 = vunpack.c.l.b16 %v252
    %v292 = vunpack.c.l.b16 %v253
    %v293 = vunpack.c.l.b16 %v254
    %v294 = vunpack.c.l.b16 %v255
    %v295 = vunpack.c.l.b16 %v256
    %v296 = vunpack.c.l.b16 %v257
    %v297 = vunpack.c.l.b16 %v258
    %v298 = vunpack.c.l.b16 %v259
    %v299 = vunpack.c.l.b16 %v260
    %v300 = vunpack.c.l.b16 %v261
    %v301 = vunpack.c.l.b16 %v262
    %v302 = vunpack.c.l.b16 %v263
    %v303 = vunpack.c.l.b16 %v264
    %v304 = vpack.c.b16 %v289, %v288
    %v305 = vpack.c.b16 %v291, %v290
    %v306 = vpack.c.b16 %v293, %v292
    %v307 = vpack.c.b16 %v295, %v294
    %v308 = vpack.c.b16 %v297, %v296
    %v309 = vpack.c.b16 %v299, %v298
    %v310 = vpack.c.b16 %v301, %v300
    %v311 = vpack.c.b16 %v303, %v302
    %320 = vmatprep.subr.bf16.mxu0 0
    %321 = vmatpush1.bf16.msra.mxu0 %v311
    %322 = vmatprep.subr.bf16.mxu0 0
    %323 = vmatpush1.bf16.msra.mxu0 %v310
    %324 = vmatprep.subr.bf16.mxu0 0
    %325 = vmatpush1.bf16.msra.mxu0 %v309
    %326 = vmatprep.subr.bf16.mxu0 0
    %327 = vmatpush1.bf16.msra.mxu0 %v308
    %328 = vmatprep.subr.bf16.mxu0 0
    %329 = vmatpush1.bf16.msra.mxu0 %v307
    %330 = vmatprep.subr.bf16.mxu0 0
    %331 = vmatpush1.bf16.msra.mxu0 %v306
    %332 = vmatprep.subr.bf16.mxu0 0
    %333 = vmatpush1.bf16.msra.mxu0 %v305
    %334 = vmatprep.subr.bf16.mxu0 0
    %335 = vmatpush1.bf16.msra.mxu0 %v304
    %336 = vmatprep.subr.bf16.mxu0 0
    %337 = vmatpush2.bf16.msra.mxu0 0
    %338 = vmatprep.subr.bf16.mxu0 0
    %339 = vmatpush2.bf16.msra.mxu0 0
    %340 = vmatprep.subr.bf16.mxu0 0
    %341 = vmatpush2.bf16.msra.mxu0 0
    %342 = vmatprep.subr.bf16.mxu0 0
    %343 = vmatpush2.bf16.msra.mxu0 0
    %344 = vmatprep.subr.bf16.mxu0 0
    %345 = vmatpush2.bf16.msra.mxu0 0
    %346 = vmatprep.subr.bf16.mxu0 0
    %347 = vmatpush2.bf16.msra.mxu0 0
    %348 = vmatprep.subr.bf16.mxu0 0
    %349 = vmatpush2.bf16.msra.mxu0 0
    %350 = vmatprep.subr.bf16.mxu0 0
    %351 = vmatpush2.bf16.msra.mxu0 0
    %352 = vmatprep.mubr.bf16.mxu0 0
    %353 = vmatmul.mubr.bf16.gmra.mxu0 %v248
    %v354 = vpop.f32.mrf.mxu0
    %v355 = vadd.f32 %v270, %v354
    %v356 = vpop.f32.mrf.mxu0
    %v357 = vpop.f32.mrf.mxu0
    %v358 = vpop.f32.mrf.mxu0
    %359 = vdwg.mxu0
    %v360 = vmax.f32 %v355, 0.0
    %v361 = vpack.c.bf16 %v360, %v360
    %v362 = vld [vmem:[%s7] sm:$0xf]
    %v363 = vld [vmem:[%s7 + $0x4] sm:$0xf]
    %v364 = vld [vmem:[%s7 + $0x8] sm:$0xf]
    %v365 = vld [vmem:[%s7 + $0xc] sm:$0xf]
    %v366 = vld [vmem:[%s7 + $0x10] sm:$0xf]
    %v367 = vld [vmem:[%s7 + $0x14] sm:$0xf]
    %v368 = vld [vmem:[%s7 + $0x18] sm:$0xf]
    %v369 = vld [vmem:[%s7 + $0x1c] sm:$0xf]
    %v370 = vld [vmem:[%s7 + $0x20] sm:$0xf]
    %v371 = vld [vmem:[%s7 + $0x24] sm:$0xf]
    %v372 = vld [vmem:[%s7 + $0x28] sm:$0xf]
    %v373 = vld [vmem:[%s7 + $0x2c] sm:$0xf]
    %v374 = vld [vmem:[%s7 + $0x30] sm:$0xf]
    %v375 = vld [vmem:[%s7 + $0x34] sm:$0xf]
    %v376 = vld [vmem:[%s7 + $0x38] sm:$0xf]
    %v377 = vld [vmem:[%s7 + $0x3c] sm:$0xf]
    %v378 = vld [vmem:[%s8] sm:$0x1]
    %v380 = vlaneseq
    %v381 = vshrl.u32 %v380, 7
    %v382 = vsub.s32 0, %v381
    %v383 = vrot.slane %v378, %v382
    %v401 = vunpack.c.l.b16 %v362
    %v402 = vunpack.c.l.b16 %v363
    %v403 = vunpack.c.l.b16 %v364
    %v404 = vunpack.c.l.b16 %v365
    %v405 = vunpack.c.l.b16 %v366
    %v406 = vunpack.c.l.b16 %v367
    %v407 = vunpack.c.l.b16 %v368
    %v408 = vunpack.c.l.b16 %v369
    %v409 = vunpack.c.l.b16 %v370
    %v410 = vunpack.c.l.b16 %v371
    %v411 = vunpack.c.l.b16 %v372
    %v412 = vunpack.c.l.b16 %v373
    %v413 = vunpack.c.l.b16 %v374
    %v414 = vunpack.c.l.b16 %v375
    %v415 = vunpack.c.l.b16 %v376
    %v416 = vunpack.c.l.b16 %v377
    %v417 = vpack.c.b16 %v402, %v401
    %v418 = vpack.c.b16 %v404, %v403
    %v419 = vpack.c.b16 %v406, %v405
    %v420 = vpack.c.b16 %v408, %v407
    %v421 = vpack.c.b16 %v410, %v409
    %v422 = vpack.c.b16 %v412, %v411
    %v423 = vpack.c.b16 %v414, %v413
    %v424 = vpack.c.b16 %v416, %v415
    %433 = vmatprep.subr.bf16.mxu0 0
    %434 = vmatpush1.bf16.msra.mxu0 %v424
    %435 = vmatprep.subr.bf16.mxu0 0
    %436 = vmatpush1.bf16.msra.mxu0 %v423
    %437 = vmatprep.subr.bf16.mxu0 0
    %438 = vmatpush1.bf16.msra.mxu0 %v422
    %439 = vmatprep.subr.bf16.mxu0 0
    %440 = vmatpush1.bf16.msra.mxu0 %v421
    %441 = vmatprep.subr.bf16.mxu0 0
    %442 = vmatpush1.bf16.msra.mxu0 %v420
    %443 = vmatprep.subr.bf16.mxu0 0
    %444 = vmatpush1.bf16.msra.mxu0 %v419
    %445 = vmatprep.subr.bf16.mxu0 0
    %446 = vmatpush1.bf16.msra.mxu0 %v418
    %447 = vmatprep.subr.bf16.mxu0 0
    %448 = vmatpush1.bf16.msra.mxu0 %v417
    %449 = vmatprep.subr.bf16.mxu0 0
    %450 = vmatpush2.bf16.msra.mxu0 0
    %451 = vmatprep.subr.bf16.mxu0 0
    %452 = vmatpush2.bf16.msra.mxu0 0
    %453 = vmatprep.subr.bf16.mxu0 0
    %454 = vmatpush2.bf16.msra.mxu0 0
    %455 = vmatprep.subr.bf16.mxu0 0
    %456 = vmatpush2.bf16.msra.mxu0 0
    %457 = vmatprep.subr.bf16.mxu0 0
    %458 = vmatpush2.bf16.msra.mxu0 0
    %459 = vmatprep.subr.bf16.mxu0 0
    %460 = vmatpush2.bf16.msra.mxu0 0
    %461 = vmatprep.subr.bf16.mxu0 0
    %462 = vmatpush2.bf16.msra.mxu0 0
    %463 = vmatprep.subr.bf16.mxu0 0
    %464 = vmatpush2.bf16.msra.mxu0 0
    %465 = vmatprep.mubr.bf16.mxu0 0
    %466 = vmatmul.mubr.bf16.gmra.mxu0 %v361
    %v467 = vpop.f32.mrf.mxu0
    %v468 = vadd.f32 %v383, %v467
    %v469 = vpop.f32.mrf.mxu0
    %v470 = vpop.f32.mrf.mxu0
    %v471 = vpop.f32.mrf.mxu0
    %472 = vdwg.mxu0
    %vm473 = vcmask 64512
    %474 = vst.msk [vmem:[#allocation8] sm:$0xff] %vm473, %v468
    // Predicated region
    $region50: #{tpu_custom_call.1} parent=1 // pred_check
      _
    $region51: #{tpu_custom_call.1} parent=1 // pred_check_branch
      %476 = sbr.rel (0) target = $region53
    $region52: #{tpu_custom_call.1} parent=1 // pred_region
      %s478 = ssub.s32 128, 128
      %479 = vsyncadd [#allocation4], %s478
      %s481 = sshll.u32 [#allocation8], 4
      %s482 = int_to_ptr.vmem [resolvable:$true] %s481
      %484 = dma.vmem_to_hbm [thread:$0]  %s482, 128, %s9, [#allocation4]
    $region53: #{tpu_custom_call.1} parent=1 // pred_fallthru
      _
    // Predicated region
    $region54: #{tpu_custom_call.1} parent=1 // pred_check
      _
    $region55: #{tpu_custom_call.1} parent=1 // pred_check_branch
      %486 = sbr.rel (0) target = $region57
    $region56: #{tpu_custom_call.1} parent=1 // pred_region
      %487 = dma.done [#allocation4], 128
    $region57: #{tpu_custom_call.1} parent=1 // pred_fallthru
      _
    %488 = vsyncpa [#allocation3], 1
    %489 = vsyncpa [#allocation6], 1
    %490 = vsyncpa [#allocation4], 1

</llo_original>
